<compile_context>
chip_gen: v5e
topology: v5e:2x2
jax: 0.10.0
libtpu: 0.0.40
codegen_flags: <defaults>
</compile_context>

<pallas_src>
import jax
import jax.numpy as jnp
from jax.experimental import pallas as pl
from jax.experimental.pallas import tpu as pltpu

_MXU_DTYPE = jnp.bfloat16  # MXU operand dtype (accumulation stays f32)


def pitch_regressor_kernel(x_ref, mask_ref, w1_ref, b1_ref, w2_ref, b2_ref,
                           w3_ref, b3_ref, out_ref, h1_scr):
    # x_ref   : (1, Cin, W+2) bf16  -- Bb batch elements lane-concatenated, each with
    #                                  its own zero pad columns, plus 1 extra zero
    #                                  column on each side of the whole slab
    # mask_ref: (1, W) f32          -- 1.0 on real time columns, 0.0 on pad columns
    # w1_ref  : (3, Hp, Cin) bf16   -- per-tap (C_out, C_in) matrices
    # b1_ref  : (Hp, 1) f32
    # w2_ref  : (3, Hp, Hp) bf16
    # b2_ref  : (Hp, 1) f32
    # w3_ref  : (1, Hp) f32         -- fc weight row
    # b3_ref  : (1, 1) f32
    # out_ref : (1, 1, W) f32       -- lane-dense output row (pad cols stripped outside)
    # h1_scr  : VMEM (Hp, W+2) bf16 -- conv-2 halo scratch
    W = out_ref.shape[2]
    Hp = w1_ref.shape[1]

    # --- Conv1d(Cin -> H, k=3, pad=1): 3 wide matmuls, M = Hp, N = W ---------
    acc1 = jnp.dot(w1_ref[0], x_ref[0, :, 0:W],
                   preferred_element_type=jnp.float32)
    acc1 = acc1 + jnp.dot(w1_ref[1], x_ref[0, :, 1:W + 1],
                          preferred_element_type=jnp.float32)
    acc1 = acc1 + jnp.dot(w1_ref[2], x_ref[0, :, 2:W + 2],
                          preferred_element_type=jnp.float32)
    # ReLU + zero the inter-element boundary columns so they act as conv2's padding
    h1 = jnp.maximum(acc1 + b1_ref[...], 0.0) * mask_ref[...]   # (Hp, W) f32
    h1_bf = h1.astype(h1_scr.dtype)                             # single cast to bf16

    # --- stash bf16 halo for conv2's +/-1 taps (center tap stays in registers)
    zcol = jnp.zeros((Hp, 1), h1_scr.dtype)
    h1_scr[:, 0:1] = zcol
    h1_scr[:, W + 1:W + 2] = zcol
    h1_scr[:, pl.ds(1, W)] = h1_bf

    # --- Conv1d(H -> H, k=3, pad=1) ------------------------------------------
    acc2 = jnp.dot(w2_ref[1], h1_bf, preferred_element_type=jnp.float32)
    acc2 = acc2 + jnp.dot(w2_ref[0], h1_scr[:, 0:W],
                          preferred_element_type=jnp.float32)
    acc2 = acc2 + jnp.dot(w2_ref[2], h1_scr[:, 2:W + 2],
                          preferred_element_type=jnp.float32)
    h2 = jnp.maximum(acc2 + b2_ref[...], 0.0)                   # (Hp, W) f32

    # --- fc Conv1d(H -> 1, k=1): (1,Hp)@(Hp,W) -> lane-dense (1,W) row --------
    row = jnp.dot(w3_ref[...], h2,
                  preferred_element_type=jnp.float32) + b3_ref[...]
    out_ref[0] = row.astype(out_ref.dtype)


def _num_tensorcores_per_chip():
    # Best-effort query; default to 1 (v5e/v6e).
    try:
        d = jax.devices()[0]
        n = getattr(d, "num_cores", None)
        if isinstance(n, int) and n > 0:
            return n
        if "v7" in str(getattr(d, "device_kind", "")).lower():
            return 2
    except Exception:
        pass
    return 1


def _pick_batch_block(B, max_fold=8):
    ncores = _num_tensorcores_per_chip()
    if ncores >= 2 and B >= 2:
        # Dual-TC chips (v7x): 2 balanced fat steps so the "parallel" axis
        # feeds both TensorCores.
        Bb = min(max_fold, (B + 1) // 2)
    else:
        # Single TC: the grid is a serial loop -- minimize steps.
        Bb = min(max_fold, B)
    nsteps = (B + Bb - 1) // Bb          # batch is padded up to Bb * nsteps
    return Bb, nsteps


def pitch_regressor_forward(x, w1, b1, w2, b2, w3, b3, *, max_fold=8):
    """PyTorch-layout forward.

    x : (B, Cin, T) f32 (NCW)
    w1: (H, Cin, 3), b1: (H,)      -- conv1
    w2: (H, H, 3),   b2: (H,)      -- conv2
    w3: (1, H, 1),   b3: (1,)      -- fc (1x1 conv)
    returns (B, 1, T) f32
    """
    B, Cin, T = x.shape
    H = w1.shape[0]
    Hp = ((H + 127) // 128) * 128          # pad hidden width to full lane tiles

    # weights -> (tap, C_out_pad, C_in[_pad]) channel-major layout, bf16 operands
    w1_k = jnp.transpose(jnp.pad(w1, ((0, Hp - H), (0, 0), (0, 0))),
                         (2, 0, 1)).astype(_MXU_DTYPE)             # (3, Hp, Cin)
    w2_k = jnp.transpose(jnp.pad(w2, ((0, Hp - H), (0, Hp - H), (0, 0))),
                         (2, 0, 1)).astype(_MXU_DTYPE)             # (3, Hp, Hp)
    b1_c = jnp.pad(b1, (0, Hp - H)).reshape(Hp, 1).astype(jnp.float32)
    b2_c = jnp.pad(b2, (0, Hp - H)).reshape(Hp, 1).astype(jnp.float32)
    w3_r = jnp.pad(w3[:, :, 0], ((0, 0), (0, Hp - H))).astype(jnp.float32)  # (1, Hp)
    b3_c = b3.reshape(1, 1).astype(jnp.float32)

    Bb, nsteps = _pick_batch_block(B, max_fold)
    Bp = Bb * nsteps
    Tseg = T + 2                       # per-element segment (own zero pads)
    W = Bb * Tseg                      # lane width per grid step

    # Build the lane-concatenated, per-element-padded bf16 input slabs.
    xb = jnp.pad(x, ((0, Bp - B), (0, 0), (1, 1)))                 # (Bp, Cin, T+2)
    xb = xb.reshape(nsteps, Bb, Cin, Tseg)
    xb = jnp.transpose(xb, (0, 2, 1, 3)).reshape(nsteps, Cin, W)   # lane-concat batch
    xb = jnp.pad(xb, ((0, 0), (0, 0), (1, 1))).astype(_MXU_DTYPE)  # (nsteps, Cin, W+2)

    # Lane mask: 1 on real time columns, 0 on the per-segment pad columns.
    pos = jnp.arange(W) % Tseg
    mask = ((pos >= 1) & (pos <= T)).astype(jnp.float32).reshape(1, W)

    out = pl.pallas_call(
        pitch_regressor_kernel,
        out_shape=jax.ShapeDtypeStruct((nsteps, 1, W), jnp.float32),
        grid_spec=pltpu.PrefetchScalarGridSpec(
            num_scalar_prefetch=0,
            grid=(nsteps,),
            in_specs=[
                pl.BlockSpec((1, Cin, W + 2), lambda g: (g, 0, 0)),
                pl.BlockSpec((1, W),          lambda g: (0, 0)),
                pl.BlockSpec((3, Hp, Cin),    lambda g: (0, 0, 0)),
                pl.BlockSpec((Hp, 1),         lambda g: (0, 0)),
                pl.BlockSpec((3, Hp, Hp),     lambda g: (0, 0, 0)),
                pl.BlockSpec((Hp, 1),         lambda g: (0, 0)),
                pl.BlockSpec((1, Hp),         lambda g: (0, 0)),
                pl.BlockSpec((1, 1),          lambda g: (0, 0)),
            ],
            out_specs=pl.BlockSpec((1, 1, W), lambda g: (g, 0, 0)),
            scratch_shapes=[pltpu.VMEM((Hp, W + 2), _MXU_DTYPE)],
        ),
        compiler_params=pltpu.CompilerParams(
            dimension_semantics=("parallel",)),
    )(xb, mask, w1_k, b1_c, w2_k, b2_c, w3_r, b3_c)

    # Strip per-element pad columns and padded batch rows (cheap XLA slice).
    out = out.reshape(nsteps, Bb, Tseg)[:, :, 1:T + 1].reshape(Bp, 1, T)
    return out[:B]


def _ref_forward(x, w1, b1, w2, b2, w3, b3):
    """Pure-JAX reference (PyTorch Conv1d semantics), mirroring the kernel's
    precision: bf16 matmul operands with f32 accumulation for the two k=3
    convolutions, f32 for the 1x1 fc."""
    def conv(xx, w, b, pad, op_dtype):
        y = jax.lax.conv_general_dilated(
            xx.astype(op_dtype), w.astype(op_dtype),
            window_strides=(1,), padding=[(pad, pad)],
            dimension_numbers=("NCH", "OIH", "NCH"),
            preferred_element_type=jnp.float32)
        return y + b[None, :, None].astype(jnp.float32)

    h = jax.nn.relu(conv(x, w1, b1, 1, _MXU_DTYPE))
    h = jax.nn.relu(conv(h, w2, b2, 1, _MXU_DTYPE))
    return conv(h, w3, b3, 0, jnp.float32)


if __name__ == "__main__":
    B, Cin, H, T = 2, 64, 100, 16

    key = jax.random.PRNGKey(0)
    kx, k1, k2, k3, k4, k5, k6 = jax.random.split(key, 7)

    x = jax.random.normal(kx, (B, Cin, T), dtype=jnp.float32)

    # deterministic synthetic parameters in PyTorch layouts
    w1 = jax.random.normal(k1, (H, Cin, 3), dtype=jnp.float32) * 0.05
    b1 = jax.random.normal(k2, (H,), dtype=jnp.float32) * 0.05
    w2 = jax.random.normal(k3, (H, H, 3), dtype=jnp.float32) * 0.05
    b2 = jax.random.normal(k4, (H,), dtype=jnp.float32) * 0.05
    w3 = jax.random.normal(k5, (1, H, 1), dtype=jnp.float32) * 0.05
    b3 = jax.random.normal(k6, (1,), dtype=jnp.float32) * 0.05

    out = pitch_regressor_forward(x, w1, b1, w2, b2, w3, b3)
    out = jax.block_until_ready(out)
    assert out.shape == (B, 1, T), out.shape

    ref = _ref_forward(x, w1, b1, w2, b2, w3, b3).astype(jnp.float32)
    max_err = float(jnp.max(jnp.abs(out - ref)))
    assert jnp.allclose(out, ref, atol=2e-3, rtol=2e-3), max_err

    print("KERNEL_OK")
</pallas_src>

<mosaic_0001>
module attributes {stable_mosaic.version = 11 : i64} {
  func.func @pitch_regressor_kernel(%arg0: i32, %arg1: memref<1x64x38xbf16, #tpu.memory_space<vmem>>, %arg2: memref<1x36xf32, #tpu.memory_space<vmem>>, %arg3: memref<3x128x64xbf16, #tpu.memory_space<vmem>>, %arg4: memref<128x1xf32, #tpu.memory_space<vmem>>, %arg5: memref<3x128x128xbf16, #tpu.memory_space<vmem>>, %arg6: memref<128x1xf32, #tpu.memory_space<vmem>>, %arg7: memref<1x128xf32, #tpu.memory_space<vmem>>, %arg8: memref<1x1xf32, #tpu.memory_space<vmem>>, %arg9: memref<1x1x36xf32, #tpu.memory_space<vmem>>, %arg10: memref<128x38xbf16, #tpu.memory_space<vmem>>) attributes {dimension_semantics = [#tpu.dimension_semantics<parallel>], iteration_bounds = array<i64: 1>, scalar_prefetch = 0 : i64, scratch_operands = 1 : i64, tpu.core_type = #tpu.core_type<tc>, window_params = [{transform_indices = @transform_0, window_bounds = array<i64: 1, 64, 38>}, {pipeline_mode = #tpu.pipeline_mode<synchronous>, transform_indices = @transform_1, window_bounds = array<i64: 1, 36>}, {pipeline_mode = #tpu.pipeline_mode<synchronous>, transform_indices = @transform_2, window_bounds = array<i64: 3, 128, 64>}, {pipeline_mode = #tpu.pipeline_mode<synchronous>, transform_indices = @transform_3, window_bounds = array<i64: 128, 1>}, {pipeline_mode = #tpu.pipeline_mode<synchronous>, transform_indices = @transform_4, window_bounds = array<i64: 3, 128, 128>}, {pipeline_mode = #tpu.pipeline_mode<synchronous>, transform_indices = @transform_5, window_bounds = array<i64: 128, 1>}, {pipeline_mode = #tpu.pipeline_mode<synchronous>, transform_indices = @transform_6, window_bounds = array<i64: 1, 128>}, {pipeline_mode = #tpu.pipeline_mode<synchronous>, transform_indices = @transform_7, window_bounds = array<i64: 1, 1>}, {transform_indices = @transform_8, window_bounds = array<i64: 1, 1, 36>}]} {
    %c0 = arith.constant 0 : index
    %c0_0 = arith.constant 0 : index
    %c0_1 = arith.constant 0 : index
    %0 = vector.load %arg3[%c0, %c0_0, %c0_1] : memref<3x128x64xbf16, #tpu.memory_space<vmem>>, vector<1x128x64xbf16>
    %1 = vector.shape_cast %0 : vector<1x128x64xbf16> to vector<128x64xbf16>
    %c0_2 = arith.constant 0 : index
    %c0_3 = arith.constant 0 : index
    %c0_4 = arith.constant 0 : index
    %2 = vector.load %arg1[%c0_2, %c0_3, %c0_4] : memref<1x64x38xbf16, #tpu.memory_space<vmem>>, vector<1x64x36xbf16>
    %3 = vector.shape_cast %2 : vector<1x64x36xbf16> to vector<64x36xbf16>
    %cst = arith.constant dense<0.000000e+00> : vector<128x36xf32>
    %4 = tpu.matmul %1, %3, %cst {dimension_numbers = #tpu.dot_dimension_numbers<[1], [0], [0], [1], [0, 0, 1, 1], [], []>} : vector<128x64xbf16>, vector<64x36xbf16>, vector<128x36xf32> -> vector<128x36xf32>
    %c1 = arith.constant 1 : index
    %c0_5 = arith.constant 0 : index
    %c0_6 = arith.constant 0 : index
    %5 = vector.load %arg3[%c1, %c0_5, %c0_6] : memref<3x128x64xbf16, #tpu.memory_space<vmem>>, vector<1x128x64xbf16>
    %6 = vector.shape_cast %5 : vector<1x128x64xbf16> to vector<128x64xbf16>
    %c0_7 = arith.constant 0 : index
    %c0_8 = arith.constant 0 : index
    %c1_9 = arith.constant 1 : index
    %7 = vector.load %arg1[%c0_7, %c0_8, %c1_9] : memref<1x64x38xbf16, #tpu.memory_space<vmem>>, vector<1x64x36xbf16>
    %8 = vector.shape_cast %7 : vector<1x64x36xbf16> to vector<64x36xbf16>
    %cst_10 = arith.constant dense<0.000000e+00> : vector<128x36xf32>
    %9 = tpu.matmul %6, %8, %cst_10 {dimension_numbers = #tpu.dot_dimension_numbers<[1], [0], [0], [1], [0, 0, 1, 1], [], []>} : vector<128x64xbf16>, vector<64x36xbf16>, vector<128x36xf32> -> vector<128x36xf32>
    %10 = arith.addf %4, %9 : vector<128x36xf32>
    %c2 = arith.constant 2 : index
    %c0_11 = arith.constant 0 : index
    %c0_12 = arith.constant 0 : index
    %11 = vector.load %arg3[%c2, %c0_11, %c0_12] : memref<3x128x64xbf16, #tpu.memory_space<vmem>>, vector<1x128x64xbf16>
    %12 = vector.shape_cast %11 : vector<1x128x64xbf16> to vector<128x64xbf16>
    %c0_13 = arith.constant 0 : index
    %c0_14 = arith.constant 0 : index
    %c2_15 = arith.constant 2 : index
    %13 = vector.load %arg1[%c0_13, %c0_14, %c2_15] : memref<1x64x38xbf16, #tpu.memory_space<vmem>>, vector<1x64x36xbf16>
    %14 = vector.shape_cast %13 : vector<1x64x36xbf16> to vector<64x36xbf16>
    %cst_16 = arith.constant dense<0.000000e+00> : vector<128x36xf32>
    %15 = tpu.matmul %12, %14, %cst_16 {dimension_numbers = #tpu.dot_dimension_numbers<[1], [0], [0], [1], [0, 0, 1, 1], [], []>} : vector<128x64xbf16>, vector<64x36xbf16>, vector<128x36xf32> -> vector<128x36xf32>
    %16 = arith.addf %10, %15 : vector<128x36xf32>
    %c0_17 = arith.constant 0 : index
    %c0_18 = arith.constant 0 : index
    %17 = vector.load %arg4[%c0_17, %c0_18] : memref<128x1xf32, #tpu.memory_space<vmem>>, vector<128x1xf32>
    %18 = vector.broadcast %17 : vector<128x1xf32> to vector<128x36xf32>
    %19 = arith.addf %16, %18 : vector<128x36xf32>
    %cst_19 = arith.constant 0.000000e+00 : f32
    %20 = vector.broadcast %cst_19 : f32 to vector<128x36xf32>
    %21 = arith.maximumf %19, %20 : vector<128x36xf32>
    %c0_20 = arith.constant 0 : index
    %c0_21 = arith.constant 0 : index
    %22 = vector.load %arg2[%c0_20, %c0_21] : memref<1x36xf32, #tpu.memory_space<vmem>>, vector<1x36xf32>
    %23 = vector.broadcast %22 : vector<1x36xf32> to vector<128x36xf32>
    %24 = arith.mulf %21, %23 : vector<128x36xf32>
    %25 = arith.truncf %24 : vector<128x36xf32> to vector<128x36xbf16>
    %cst_22 = arith.constant 0.000000e+00 : bf16
    %26 = vector.broadcast %cst_22 : bf16 to vector<128x1xbf16>
    %c0_23 = arith.constant 0 : index
    %c0_24 = arith.constant 0 : index
    %27 = vector.load %arg10[%c0_23, %c0_24] : memref<128x38xbf16, #tpu.memory_space<vmem>>, vector<128x1xbf16>
    tpu.vector_store %arg10[%c0_23, %c0_24], %26 {strides = array<i32>} : memref<128x38xbf16, #tpu.memory_space<vmem>>, vector<128x1xbf16>,
    %c0_25 = arith.constant 0 : index
    %c37 = arith.constant 37 : index
    %28 = vector.load %arg10[%c0_25, %c37] : memref<128x38xbf16, #tpu.memory_space<vmem>>, vector<128x1xbf16>
    tpu.vector_store %arg10[%c0_25, %c37], %26 {strides = array<i32>} : memref<128x38xbf16, #tpu.memory_space<vmem>>, vector<128x1xbf16>,
    %c0_26 = arith.constant 0 : index
    %c1_27 = arith.constant 1 : index
    %29 = vector.load %arg10[%c0_26, %c1_27] : memref<128x38xbf16, #tpu.memory_space<vmem>>, vector<128x36xbf16>
    tpu.vector_store %arg10[%c0_26, %c1_27], %25 {strides = array<i32>} : memref<128x38xbf16, #tpu.memory_space<vmem>>, vector<128x36xbf16>,
    %c1_28 = arith.constant 1 : index
    %c0_29 = arith.constant 0 : index
    %c0_30 = arith.constant 0 : index
    %30 = vector.load %arg5[%c1_28, %c0_29, %c0_30] : memref<3x128x128xbf16, #tpu.memory_space<vmem>>, vector<1x128x128xbf16>
    %31 = vector.shape_cast %30 : vector<1x128x128xbf16> to vector<128x128xbf16>
    %cst_31 = arith.constant dense<0.000000e+00> : vector<128x36xf32>
    %32 = tpu.matmul %31, %25, %cst_31 {dimension_numbers = #tpu.dot_dimension_numbers<[1], [0], [0], [1], [0, 0, 1, 1], [], []>} : vector<128x128xbf16>, vector<128x36xbf16>, vector<128x36xf32> -> vector<128x36xf32>
    %c0_32 = arith.constant 0 : index
    %c0_33 = arith.constant 0 : index
    %c0_34 = arith.constant 0 : index
    %33 = vector.load %arg5[%c0_32, %c0_33, %c0_34] : memref<3x128x128xbf16, #tpu.memory_space<vmem>>, vector<1x128x128xbf16>
    %34 = vector.shape_cast %33 : vector<1x128x128xbf16> to vector<128x128xbf16>
    %c0_35 = arith.constant 0 : index
    %c0_36 = arith.constant 0 : index
    %35 = vector.load %arg10[%c0_35, %c0_36] : memref<128x38xbf16, #tpu.memory_space<vmem>>, vector<128x36xbf16>
    %cst_37 = arith.constant dense<0.000000e+00> : vector<128x36xf32>
    %36 = tpu.matmul %34, %35, %cst_37 {dimension_numbers = #tpu.dot_dimension_numbers<[1], [0], [0], [1], [0, 0, 1, 1], [], []>} : vector<128x128xbf16>, vector<128x36xbf16>, vector<128x36xf32> -> vector<128x36xf32>
    %37 = arith.addf %32, %36 : vector<128x36xf32>
    %c2_38 = arith.constant 2 : index
    %c0_39 = arith.constant 0 : index
    %c0_40 = arith.constant 0 : index
    %38 = vector.load %arg5[%c2_38, %c0_39, %c0_40] : memref<3x128x128xbf16, #tpu.memory_space<vmem>>, vector<1x128x128xbf16>
    %39 = vector.shape_cast %38 : vector<1x128x128xbf16> to vector<128x128xbf16>
    %c0_41 = arith.constant 0 : index
    %c2_42 = arith.constant 2 : index
    %40 = vector.load %arg10[%c0_41, %c2_42] : memref<128x38xbf16, #tpu.memory_space<vmem>>, vector<128x36xbf16>
    %cst_43 = arith.constant dense<0.000000e+00> : vector<128x36xf32>
    %41 = tpu.matmul %39, %40, %cst_43 {dimension_numbers = #tpu.dot_dimension_numbers<[1], [0], [0], [1], [0, 0, 1, 1], [], []>} : vector<128x128xbf16>, vector<128x36xbf16>, vector<128x36xf32> -> vector<128x36xf32>
    %42 = arith.addf %37, %41 : vector<128x36xf32>
    %c0_44 = arith.constant 0 : index
    %c0_45 = arith.constant 0 : index
    %43 = vector.load %arg6[%c0_44, %c0_45] : memref<128x1xf32, #tpu.memory_space<vmem>>, vector<128x1xf32>
    %44 = vector.broadcast %43 : vector<128x1xf32> to vector<128x36xf32>
    %45 = arith.addf %42, %44 : vector<128x36xf32>
    %cst_46 = arith.constant 0.000000e+00 : f32
    %46 = vector.broadcast %cst_46 : f32 to vector<128x36xf32>
    %47 = arith.maximumf %45, %46 : vector<128x36xf32>
    %c0_47 = arith.constant 0 : index
    %c0_48 = arith.constant 0 : index
    %48 = vector.load %arg7[%c0_47, %c0_48] : memref<1x128xf32, #tpu.memory_space<vmem>>, vector<1x128xf32>
    %cst_49 = arith.constant dense<0.000000e+00> : vector<1x36xf32>
    %49 = tpu.matmul %48, %47, %cst_49 {dimension_numbers = #tpu.dot_dimension_numbers<[1], [0], [0], [1], [0, 0, 1, 1], [], []>} : vector<1x128xf32>, vector<128x36xf32>, vector<1x36xf32> -> vector<1x36xf32>
    %c0_50 = arith.constant 0 : index
    %c0_51 = arith.constant 0 : index
    %50 = vector.load %arg8[%c0_50, %c0_51] : memref<1x1xf32, #tpu.memory_space<vmem>>, vector<1x1xf32>
    %51 = vector.broadcast %50 : vector<1x1xf32> to vector<1x36xf32>
    %52 = arith.addf %49, %51 : vector<1x36xf32>
    %c0_52 = arith.constant 0 : index
    %c0_53 = arith.constant 0 : index
    %c0_54 = arith.constant 0 : index
    %53 = vector.load %arg9[%c0_52, %c0_53, %c0_54] : memref<1x1x36xf32, #tpu.memory_space<vmem>>, vector<1x1x36xf32>
    %54 = vector.shape_cast %53 : vector<1x1x36xf32> to vector<1x36xf32>
    %55 = vector.shape_cast %52 : vector<1x36xf32> to vector<1x1x36xf32>
    tpu.vector_store %arg9[%c0_52, %c0_53, %c0_54], %55 {strides = array<i32>} : memref<1x1x36xf32, #tpu.memory_space<vmem>>, vector<1x1x36xf32>,
    return
  }
  func.func @transform_0(%arg0: i32) -> (i32, i32, i32) {
    %c0_i32 = arith.constant 0 : i32
    %c0_i32_0 = arith.constant 0 : i32
    %c0_i32_1 = arith.constant 0 : i32
    return %arg0, %c0_i32, %c0_i32_0 : i32, i32, i32
  }
  func.func @transform_1(%arg0: i32) -> (i32, i32) {
    %c0_i32 = arith.constant 0 : i32
    %c0_i32_0 = arith.constant 0 : i32
    %c0_i32_1 = arith.constant 0 : i32
    return %c0_i32, %c0_i32_0 : i32, i32
  }
  func.func @transform_2(%arg0: i32) -> (i32, i32, i32) {
    %c0_i32 = arith.constant 0 : i32
    %c0_i32_0 = arith.constant 0 : i32
    %c0_i32_1 = arith.constant 0 : i32
    %c0_i32_2 = arith.constant 0 : i32
    return %c0_i32, %c0_i32_0, %c0_i32_1 : i32, i32, i32
  }
  func.func @transform_3(%arg0: i32) -> (i32, i32) {
    %c0_i32 = arith.constant 0 : i32
    %c0_i32_0 = arith.constant 0 : i32
    %c0_i32_1 = arith.constant 0 : i32
    return %c0_i32, %c0_i32_0 : i32, i32
  }
  func.func @transform_4(%arg0: i32) -> (i32, i32, i32) {
    %c0_i32 = arith.constant 0 : i32
    %c0_i32_0 = arith.constant 0 : i32
    %c0_i32_1 = arith.constant 0 : i32
    %c0_i32_2 = arith.constant 0 : i32
    return %c0_i32, %c0_i32_0, %c0_i32_1 : i32, i32, i32
  }
  func.func @transform_5(%arg0: i32) -> (i32, i32) {
    %c0_i32 = arith.constant 0 : i32
    %c0_i32_0 = arith.constant 0 : i32
    %c0_i32_1 = arith.constant 0 : i32
    return %c0_i32, %c0_i32_0 : i32, i32
  }
  func.func @transform_6(%arg0: i32) -> (i32, i32) {
    %c0_i32 = arith.constant 0 : i32
    %c0_i32_0 = arith.constant 0 : i32
    %c0_i32_1 = arith.constant 0 : i32
    return %c0_i32, %c0_i32_0 : i32, i32
  }
  func.func @transform_7(%arg0: i32) -> (i32, i32) {
    %c0_i32 = arith.constant 0 : i32
    %c0_i32_0 = arith.constant 0 : i32
    %c0_i32_1 = arith.constant 0 : i32
    return %c0_i32, %c0_i32_0 : i32, i32
  }
  func.func @transform_8(%arg0: i32) -> (i32, i32, i32) {
    %c0_i32 = arith.constant 0 : i32
    %c0_i32_0 = arith.constant 0 : i32
    %c0_i32_1 = arith.constant 0 : i32
    return %arg0, %c0_i32, %c0_i32_0 : i32, i32, i32
  }
}

</mosaic_0001>

<llo_original>
// kernel: tpu_custom_call.1
$region0: #{tpu_custom_call.1}
  #allocation0 [shape = 'u32[]', space=smem, size = 0x4, offset = 0x4, fixed_abs, tag = 'smem constant byte address 0x4 - core index']
  #allocation1 [shape = 'u32[72,128]{1,0:T(1,128)}', space=vmem, size = 0x9000, scoped, tag = 'internal scratch']
  #allocation2 [shape = 'bf16[128,38]{1,0:T(8,128)(2,1)}', space=vmem, size = 0x8000, scoped, tag = 'scratch operand']
  #allocation3 [shape = 'f32[1,1]{1,0:T(1,128)S(1)}', space=vmem, size = 0x200, scoped, tag = 'scoped memory for tpu_custom_call.1']
  %s0 = inlined_call_operand.vmem [shape: bf16[1,64,38], index: 0, kind: input, shape index: {}]
  %s1 = inlined_call_operand.vmem [shape: f32[1,36], index: 1, kind: input, shape index: {}]
  %s2 = inlined_call_operand.vmem [shape: bf16[3,128,64], index: 2, kind: input, shape index: {}]
  %s3 = inlined_call_operand.vmem [shape: f32[128,1], index: 3, kind: input, shape index: {}]
  %s4 = inlined_call_operand.vmem [shape: bf16[3,128,128], index: 4, kind: input, shape index: {}]
  %s5 = inlined_call_operand.vmem [shape: f32[128,1], index: 5, kind: input, shape index: {}]
  %s6 = inlined_call_operand.vmem [shape: f32[1,128], index: 6, kind: input, shape index: {}]
  %s7 = inlined_call_operand.<no memory space> [shape: f32[1,1], index: 7, kind: input, shape index: {}]
  %s8 = inlined_call_operand.hbm [shape: f32[1,1,36], index: 8, kind: output, shape index: {}]
  %s9 = sld [smem:[#allocation0]]
  $region42: #{tpu_custom_call.1} parent=0
    _
  %s11 = ssub.s32 1, %s9
  %s12 = scalar_select 0, %s11, %s9
  %v13 = vstv %s7
  %14 = vst [vmem:[#allocation3] sm:$0x1] %v13
  $region1: #{tpu_custom_call.1} parent=0
    #allocation4 [shape = 'u8[512]{0}', space=vmem, size = 0x400, scoped, tag = 'output window, operand 0, single buffered']
    #allocation5 [shape = 's32[1]{0}', space=sflag, size = 0x4, scoped, tag = 'scoped memory for tpu_custom_call.1']
    %15 = vsyncpa [#allocation5], 0
    // Predicated region
    $region2: #{tpu_custom_call.1} parent=1 // pred_check
      _
    $region3: #{tpu_custom_call.1} parent=1 // pred_check_branch
      %17 = sbr.rel (0) target = $region5
    $region4: #{tpu_custom_call.1} parent=1 // pred_region
      _
    $region5: #{tpu_custom_call.1} parent=1 // pred_fallthru
      _
    // Predicated region
    $region6: #{tpu_custom_call.1} parent=1 // pred_check
      _
    $region7: #{tpu_custom_call.1} parent=1 // pred_check_branch
      %19 = sbr.rel (0) target = $region9
    $region8: #{tpu_custom_call.1} parent=1 // pred_region
      _
    $region9: #{tpu_custom_call.1} parent=1 // pred_fallthru
      _
    // Predicated region
    $region10: #{tpu_custom_call.1} parent=1 // pred_check
      _
    $region11: #{tpu_custom_call.1} parent=1 // pred_check_branch
      %21 = sbr.rel (0) target = $region13
    $region12: #{tpu_custom_call.1} parent=1 // pred_region
      _
    $region13: #{tpu_custom_call.1} parent=1 // pred_fallthru
      _
    // Predicated region
    $region14: #{tpu_custom_call.1} parent=1 // pred_check
      _
    $region15: #{tpu_custom_call.1} parent=1 // pred_check_branch
      %23 = sbr.rel (0) target = $region17
    $region16: #{tpu_custom_call.1} parent=1 // pred_region
      _
    $region17: #{tpu_custom_call.1} parent=1 // pred_fallthru
      _
    // Predicated region
    $region18: #{tpu_custom_call.1} parent=1 // pred_check
      _
    $region19: #{tpu_custom_call.1} parent=1 // pred_check_branch
      %25 = sbr.rel (0) target = $region21
    $region20: #{tpu_custom_call.1} parent=1 // pred_region
      _
    $region21: #{tpu_custom_call.1} parent=1 // pred_fallthru
      _
    // Predicated region
    $region22: #{tpu_custom_call.1} parent=1 // pred_check
      _
    $region23: #{tpu_custom_call.1} parent=1 // pred_check_branch
      %27 = sbr.rel (0) target = $region25
    $region24: #{tpu_custom_call.1} parent=1 // pred_region
      _
    $region25: #{tpu_custom_call.1} parent=1 // pred_fallthru
      _
    // Predicated region
    $region26: #{tpu_custom_call.1} parent=1 // pred_check
      _
    $region27: #{tpu_custom_call.1} parent=1 // pred_check_branch
      %29 = sbr.rel (0) target = $region29
    $region28: #{tpu_custom_call.1} parent=1 // pred_region
      _
    $region29: #{tpu_custom_call.1} parent=1 // pred_fallthru
      _
    // Predicated region
    $region30: #{tpu_custom_call.1} parent=1 // pred_check
      _
    $region31: #{tpu_custom_call.1} parent=1 // pred_check_branch
      %31 = sbr.rel (0) target = $region33
    $region32: #{tpu_custom_call.1} parent=1 // pred_region
      _
    $region33: #{tpu_custom_call.1} parent=1 // pred_fallthru
      _
    %v33 = vld [vmem:[%s2] sm:$0xf]
    %v34 = vld [vmem:[%s2 + $0x4] sm:$0xf]
    %v35 = vld [vmem:[%s2 + $0x8] sm:$0xf]
    %v36 = vld [vmem:[%s2 + $0xc] sm:$0xf]
    %v37 = vld [vmem:[%s2 + $0x10] sm:$0xf]
    %v38 = vld [vmem:[%s2 + $0x14] sm:$0xf]
    %v39 = vld [vmem:[%s2 + $0x18] sm:$0xf]
    %v40 = vld [vmem:[%s2 + $0x1c] sm:$0xf]
    %v41 = vld [vmem:[%s2 + $0x20] sm:$0xf]
    %v42 = vld [vmem:[%s2 + $0x24] sm:$0xf]
    %v43 = vld [vmem:[%s2 + $0x28] sm:$0xf]
    %v44 = vld [vmem:[%s2 + $0x2c] sm:$0xf]
    %v45 = vld [vmem:[%s2 + $0x30] sm:$0xf]
    %v46 = vld [vmem:[%s2 + $0x34] sm:$0xf]
    %v47 = vld [vmem:[%s2 + $0x38] sm:$0xf]
    %v48 = vld [vmem:[%s2 + $0x3c] sm:$0xf]
    %v49 = vld [vmem:[%s0] sm:$0xf]
    %v50 = vld [vmem:[%s0 + $0x4] sm:$0xf]
    %v51 = vld [vmem:[%s0 + $0x8] sm:$0xf]
    %v52 = vld [vmem:[%s0 + $0xc] sm:$0xf]
    %v53 = vld [vmem:[%s0 + $0x10] sm:$0xf]
    %v54 = vld [vmem:[%s0 + $0x14] sm:$0xf]
    %v55 = vld [vmem:[%s0 + $0x18] sm:$0xf]
    %v56 = vld [vmem:[%s0 + $0x1c] sm:$0xf]
    %s57 = scalar_lea.vmem %s2, 64
    %v58 = vld [vmem:[%s57] sm:$0xf]
    %v59 = vld [vmem:[%s57 + $0x4] sm:$0xf]
    %v60 = vld [vmem:[%s57 + $0x8] sm:$0xf]
    %v61 = vld [vmem:[%s57 + $0xc] sm:$0xf]
    %v62 = vld [vmem:[%s57 + $0x10] sm:$0xf]
    %v63 = vld [vmem:[%s57 + $0x14] sm:$0xf]
    %v64 = vld [vmem:[%s57 + $0x18] sm:$0xf]
    %v65 = vld [vmem:[%s57 + $0x1c] sm:$0xf]
    %v66 = vld [vmem:[%s57 + $0x20] sm:$0xf]
    %v67 = vld [vmem:[%s57 + $0x24] sm:$0xf]
    %v68 = vld [vmem:[%s57 + $0x28] sm:$0xf]
    %v69 = vld [vmem:[%s57 + $0x2c] sm:$0xf]
    %v70 = vld [vmem:[%s57 + $0x30] sm:$0xf]
    %v71 = vld [vmem:[%s57 + $0x34] sm:$0xf]
    %v72 = vld [vmem:[%s57 + $0x38] sm:$0xf]
    %v73 = vld [vmem:[%s57 + $0x3c] sm:$0xf]
    %v90 = vunpack.c.l.b16 %v58
    %v91 = vunpack.c.l.b16 %v59
    %v92 = vunpack.c.l.b16 %v60
    %v93 = vunpack.c.l.b16 %v61
    %v94 = vunpack.c.l.b16 %v62
    %v95 = vunpack.c.l.b16 %v63
    %v96 = vunpack.c.l.b16 %v64
    %v97 = vunpack.c.l.b16 %v65
    %v98 = vunpack.c.l.b16 %v66
    %v99 = vunpack.c.l.b16 %v67
    %v100 = vunpack.c.l.b16 %v68
    %v101 = vunpack.c.l.b16 %v69
    %v102 = vunpack.c.l.b16 %v70
    %v103 = vunpack.c.l.b16 %v71
    %v104 = vunpack.c.l.b16 %v72
    %v105 = vunpack.c.l.b16 %v73
    %v106 = vpack.c.b16 %v91, %v90
    %v107 = vpack.c.b16 %v93, %v92
    %v108 = vpack.c.b16 %v95, %v94
    %v109 = vpack.c.b16 %v97, %v96
    %v110 = vpack.c.b16 %v99, %v98
    %v111 = vpack.c.b16 %v101, %v100
    %v112 = vpack.c.b16 %v103, %v102
    %v113 = vpack.c.b16 %v105, %v104
    %v122 = vunpack.c.l.b16 %v49
    %v123 = vunpack.c.l.b16 %v50
    %v124 = vunpack.c.l.b16 %v51
    %v125 = vunpack.c.l.b16 %v52
    %v126 = vunpack.c.l.b16 %v53
    %v127 = vunpack.c.l.b16 %v54
    %v128 = vunpack.c.l.b16 %v55
    %v129 = vunpack.c.l.b16 %v56
    %v130 = vpack.c.b16 %v123, %v122
    %v131 = vpack.c.b16 %v125, %v124
    %v132 = vpack.c.b16 %v127, %v126
    %v133 = vpack.c.b16 %v129, %v128
    %134 = vrot.lane.b32.xlu0 %v130, 127
    %v135 = vpop.permute.xlu0 %134
    %136 = vrot.lane.b32.xlu0 %v131, 127
    %v137 = vpop.permute.xlu0 %136
    %138 = vrot.lane.b32.xlu0 %v132, 127
    %v139 = vpop.permute.xlu0 %138
    %140 = vrot.lane.b32.xlu0 %v133, 127
    %v141 = vpop.permute.xlu0 %140
    %vm146 = vcmask 523264
    %v148 = vsel %vm146, %v106, 0
    %v151 = vsel %vm146, %v107, 0
    %v154 = vsel %vm146, %v108, 0
    %v157 = vsel %vm146, %v109, 0
    %v160 = vsel %vm146, %v110, 0
    %v163 = vsel %vm146, %v111, 0
    %v166 = vsel %vm146, %v112, 0
    %v169 = vsel %vm146, %v113, 0
    %171 = vmatpush.bf16.msra.mxu0 0
    %172 = vmatpush.bf16.msra.mxu0 0
    %173 = vmatpush.bf16.msra.mxu0 0
    %174 = vmatpush.bf16.msra.mxu0 0
    %175 = vmatpush.bf16.msra.mxu0 %v141
    %176 = vmatpush.bf16.msra.mxu0 %v139
    %177 = vmatpush.bf16.msra.mxu0 %v137
    %178 = vmatpush.bf16.msra.mxu0 %v135
    %179 = vmatmul.bf16.gmra.mxu0 %v148
    %v180 = vpop.f32.mrf.mxu0
    %v181 = vadd.f32 0.0, %v180
    %v182 = vpop.f32.mrf.mxu0
    %v183 = vadd.f32 0.0, %v182
    %184 = vmatmul.bf16.gmra.mxu0 %v151
    %v185 = vpop.f32.mrf.mxu0
    %v186 = vadd.f32 0.0, %v185
    %v187 = vpop.f32.mrf.mxu0
    %v188 = vadd.f32 0.0, %v187
    %189 = vmatmul.bf16.gmra.mxu0 %v154
    %v190 = vpop.f32.mrf.mxu0
    %v191 = vadd.f32 0.0, %v190
    %v192 = vpop.f32.mrf.mxu0
    %v193 = vadd.f32 0.0, %v192
    %194 = vmatmul.bf16.gmra.mxu0 %v157
    %v195 = vpop.f32.mrf.mxu0
    %v196 = vadd.f32 0.0, %v195
    %v197 = vpop.f32.mrf.mxu0
    %v198 = vadd.f32 0.0, %v197
    %199 = vmatmul.bf16.gmra.mxu0 %v160
    %v200 = vpop.f32.mrf.mxu0
    %v201 = vadd.f32 0.0, %v200
    %v202 = vpop.f32.mrf.mxu0
    %v203 = vadd.f32 0.0, %v202
    %204 = vmatmul.bf16.gmra.mxu0 %v163
    %v205 = vpop.f32.mrf.mxu0
    %v206 = vadd.f32 0.0, %v205
    %v207 = vpop.f32.mrf.mxu0
    %v208 = vadd.f32 0.0, %v207
    %209 = vmatmul.bf16.gmra.mxu0 %v166
    %v210 = vpop.f32.mrf.mxu0
    %v211 = vadd.f32 0.0, %v210
    %v212 = vpop.f32.mrf.mxu0
    %v213 = vadd.f32 0.0, %v212
    %214 = vmatmul.bf16.gmra.mxu0 %v169
    %v215 = vpop.f32.mrf.mxu0
    %v216 = vadd.f32 0.0, %v215
    %v217 = vpop.f32.mrf.mxu0
    %v218 = vadd.f32 0.0, %v217
    %219 = vdwg.mxu0
    %v236 = vunpack.c.l.b16 %v33
    %v237 = vunpack.c.l.b16 %v34
    %v238 = vunpack.c.l.b16 %v35
    %v239 = vunpack.c.l.b16 %v36
    %v240 = vunpack.c.l.b16 %v37
    %v241 = vunpack.c.l.b16 %v38
    %v242 = vunpack.c.l.b16 %v39
    %v243 = vunpack.c.l.b16 %v40
    %v244 = vunpack.c.l.b16 %v41
    %v245 = vunpack.c.l.b16 %v42
    %v246 = vunpack.c.l.b16 %v43
    %v247 = vunpack.c.l.b16 %v44
    %v248 = vunpack.c.l.b16 %v45
    %v249 = vunpack.c.l.b16 %v46
    %v250 = vunpack.c.l.b16 %v47
    %v251 = vunpack.c.l.b16 %v48
    %v252 = vpack.c.b16 %v237, %v236
    %v253 = vpack.c.b16 %v239, %v238
    %v254 = vpack.c.b16 %v241, %v240
    %v255 = vpack.c.b16 %v243, %v242
    %v256 = vpack.c.b16 %v245, %v244
    %v257 = vpack.c.b16 %v247, %v246
    %v258 = vpack.c.b16 %v249, %v248
    %v259 = vpack.c.b16 %v251, %v250
    %v265 = vsel %vm146, %v252, 0
    %v268 = vsel %vm146, %v253, 0
    %v271 = vsel %vm146, %v254, 0
    %v274 = vsel %vm146, %v255, 0
    %v277 = vsel %vm146, %v256, 0
    %v280 = vsel %vm146, %v257, 0
    %v283 = vsel %vm146, %v258, 0
    %v286 = vsel %vm146, %v259, 0
    %288 = vmatpush.bf16.msra.mxu0 0
    %289 = vmatpush.bf16.msra.mxu0 0
    %290 = vmatpush.bf16.msra.mxu0 0
    %291 = vmatpush.bf16.msra.mxu0 0
    %292 = vmatpush.bf16.msra.mxu0 %v133
    %293 = vmatpush.bf16.msra.mxu0 %v132
    %294 = vmatpush.bf16.msra.mxu0 %v131
    %295 = vmatpush.bf16.msra.mxu0 %v130
    %296 = vmatmul.bf16.gmra.mxu0 %v265
    %v297 = vpop.f32.mrf.mxu0
    %v298 = vadd.f32 %v181, %v297
    %v299 = vpop.f32.mrf.mxu0
    %v300 = vadd.f32 %v183, %v299
    %301 = vmatmul.bf16.gmra.mxu0 %v268
    %v302 = vpop.f32.mrf.mxu0
    %v303 = vadd.f32 %v186, %v302
    %v304 = vpop.f32.mrf.mxu0
    %v305 = vadd.f32 %v188, %v304
    %306 = vmatmul.bf16.gmra.mxu0 %v271
    %v307 = vpop.f32.mrf.mxu0
    %v308 = vadd.f32 %v191, %v307
    %v309 = vpop.f32.mrf.mxu0
    %v310 = vadd.f32 %v193, %v309
    %311 = vmatmul.bf16.gmra.mxu0 %v274
    %v312 = vpop.f32.mrf.mxu0
    %v313 = vadd.f32 %v196, %v312
    %v314 = vpop.f32.mrf.mxu0
    %v315 = vadd.f32 %v198, %v314
    %316 = vmatmul.bf16.gmra.mxu0 %v277
    %v317 = vpop.f32.mrf.mxu0
    %v318 = vadd.f32 %v201, %v317
    %v319 = vpop.f32.mrf.mxu0
    %v320 = vadd.f32 %v203, %v319
    %321 = vmatmul.bf16.gmra.mxu0 %v280
    %v322 = vpop.f32.mrf.mxu0
    %v323 = vadd.f32 %v206, %v322
    %v324 = vpop.f32.mrf.mxu0
    %v325 = vadd.f32 %v208, %v324
    %326 = vmatmul.bf16.gmra.mxu0 %v283
    %v327 = vpop.f32.mrf.mxu0
    %v328 = vadd.f32 %v211, %v327
    %v329 = vpop.f32.mrf.mxu0
    %v330 = vadd.f32 %v213, %v329
    %331 = vmatmul.bf16.gmra.mxu0 %v286
    %v332 = vpop.f32.mrf.mxu0
    %v333 = vadd.f32 %v216, %v332
    %v334 = vpop.f32.mrf.mxu0
    %v335 = vadd.f32 %v218, %v334
    %336 = vdwg.mxu0
    %s337 = scalar_lea.vmem %s2, 128
    %v338 = vld [vmem:[%s337] sm:$0xf]
    %v339 = vld [vmem:[%s337 + $0x4] sm:$0xf]
    %v340 = vld [vmem:[%s337 + $0x8] sm:$0xf]
    %v341 = vld [vmem:[%s337 + $0xc] sm:$0xf]
    %v342 = vld [vmem:[%s337 + $0x10] sm:$0xf]
    %v343 = vld [vmem:[%s337 + $0x14] sm:$0xf]
    %v344 = vld [vmem:[%s337 + $0x18] sm:$0xf]
    %v345 = vld [vmem:[%s337 + $0x1c] sm:$0xf]
    %v346 = vld [vmem:[%s337 + $0x20] sm:$0xf]
    %v347 = vld [vmem:[%s337 + $0x24] sm:$0xf]
    %v348 = vld [vmem:[%s337 + $0x28] sm:$0xf]
    %v349 = vld [vmem:[%s337 + $0x2c] sm:$0xf]
    %v350 = vld [vmem:[%s337 + $0x30] sm:$0xf]
    %v351 = vld [vmem:[%s337 + $0x34] sm:$0xf]
    %v352 = vld [vmem:[%s337 + $0x38] sm:$0xf]
    %v353 = vld [vmem:[%s337 + $0x3c] sm:$0xf]
    %v370 = vunpack.c.l.b16 %v338
    %v371 = vunpack.c.l.b16 %v339
    %v372 = vunpack.c.l.b16 %v340
    %v373 = vunpack.c.l.b16 %v341
    %v374 = vunpack.c.l.b16 %v342
    %v375 = vunpack.c.l.b16 %v343
    %v376 = vunpack.c.l.b16 %v344
    %v377 = vunpack.c.l.b16 %v345
    %v378 = vunpack.c.l.b16 %v346
    %v379 = vunpack.c.l.b16 %v347
    %v380 = vunpack.c.l.b16 %v348
    %v381 = vunpack.c.l.b16 %v349
    %v382 = vunpack.c.l.b16 %v350
    %v383 = vunpack.c.l.b16 %v351
    %v384 = vunpack.c.l.b16 %v352
    %v385 = vunpack.c.l.b16 %v353
    %v386 = vpack.c.b16 %v371, %v370
    %v387 = vpack.c.b16 %v373, %v372
    %v388 = vpack.c.b16 %v375, %v374
    %v389 = vpack.c.b16 %v377, %v376
    %v390 = vpack.c.b16 %v379, %v378
    %v391 = vpack.c.b16 %v381, %v380
    %v392 = vpack.c.b16 %v383, %v382
    %v393 = vpack.c.b16 %v385, %v384
    %394 = vrot.lane.b32.xlu0 %v130, 126
    %v395 = vpop.permute.xlu0 %394
    %396 = vrot.lane.b32.xlu0 %v131, 126
    %v397 = vpop.permute.xlu0 %396
    %398 = vrot.lane.b32.xlu0 %v132, 126
    %v399 = vpop.permute.xlu0 %398
    %400 = vrot.lane.b32.xlu0 %v133, 126
    %v401 = vpop.permute.xlu0 %400
    %v407 = vsel %vm146, %v386, 0
    %v410 = vsel %vm146, %v387, 0
    %v413 = vsel %vm146, %v388, 0
    %v416 = vsel %vm146, %v389, 0
    %v419 = vsel %vm146, %v390, 0
    %v422 = vsel %vm146, %v391, 0
    %v425 = vsel %vm146, %v392, 0
    %v428 = vsel %vm146, %v393, 0
    %430 = vmatpush.bf16.msra.mxu0 0
    %431 = vmatpush.bf16.msra.mxu0 0
    %432 = vmatpush.bf16.msra.mxu0 0
    %433 = vmatpush.bf16.msra.mxu0 0
    %434 = vmatpush.bf16.msra.mxu0 %v401
    %435 = vmatpush.bf16.msra.mxu0 %v399
    %436 = vmatpush.bf16.msra.mxu0 %v397
    %437 = vmatpush.bf16.msra.mxu0 %v395
    %438 = vmatmul.bf16.gmra.mxu0 %v407
    %v439 = vpop.f32.mrf.mxu0
    %v440 = vadd.f32 0.0, %v439
    %v441 = vpop.f32.mrf.mxu0
    %v442 = vadd.f32 0.0, %v441
    %443 = vmatmul.bf16.gmra.mxu0 %v410
    %v444 = vpop.f32.mrf.mxu0
    %v445 = vadd.f32 0.0, %v444
    %v446 = vpop.f32.mrf.mxu0
    %v447 = vadd.f32 0.0, %v446
    %448 = vmatmul.bf16.gmra.mxu0 %v413
    %v449 = vpop.f32.mrf.mxu0
    %v450 = vadd.f32 0.0, %v449
    %v451 = vpop.f32.mrf.mxu0
    %v452 = vadd.f32 0.0, %v451
    %453 = vmatmul.bf16.gmra.mxu0 %v416
    %v454 = vpop.f32.mrf.mxu0
    %v455 = vadd.f32 0.0, %v454
    %v456 = vpop.f32.mrf.mxu0
    %v457 = vadd.f32 0.0, %v456
    %458 = vmatmul.bf16.gmra.mxu0 %v419
    %v459 = vpop.f32.mrf.mxu0
    %v460 = vadd.f32 0.0, %v459
    %v461 = vpop.f32.mrf.mxu0
    %v462 = vadd.f32 0.0, %v461
    %463 = vmatmul.bf16.gmra.mxu0 %v422
    %v464 = vpop.f32.mrf.mxu0
    %v465 = vadd.f32 0.0, %v464
    %v466 = vpop.f32.mrf.mxu0
    %v467 = vadd.f32 0.0, %v466
    %468 = vmatmul.bf16.gmra.mxu0 %v425
    %v469 = vpop.f32.mrf.mxu0
    %v470 = vadd.f32 0.0, %v469
    %v471 = vpop.f32.mrf.mxu0
    %v472 = vadd.f32 0.0, %v471
    %473 = vmatmul.bf16.gmra.mxu0 %v428
    %v474 = vpop.f32.mrf.mxu0
    %v475 = vadd.f32 0.0, %v474
    %v476 = vpop.f32.mrf.mxu0
    %v477 = vadd.f32 0.0, %v476
    %478 = vdwg.mxu0
    %v479 = vadd.f32 %v298, %v440
    %v480 = vadd.f32 %v300, %v442
    %v481 = vadd.f32 %v303, %v445
    %v482 = vadd.f32 %v305, %v447
    %v483 = vadd.f32 %v308, %v450
    %v484 = vadd.f32 %v310, %v452
    %v485 = vadd.f32 %v313, %v455
    %v486 = vadd.f32 %v315, %v457
    %v487 = vadd.f32 %v318, %v460
    %v488 = vadd.f32 %v320, %v462
    %v489 = vadd.f32 %v323, %v465
    %v490 = vadd.f32 %v325, %v467
    %v491 = vadd.f32 %v328, %v470
    %v492 = vadd.f32 %v330, %v472
    %v493 = vadd.f32 %v333, %v475
    %v494 = vadd.f32 %v335, %v477
    %v495 = vld [vmem:[%s3] sm:$0xff]
    %v496 = vld [vmem:[%s3 + $0x8] sm:$0xff]
    %v497 = vld [vmem:[%s3 + $0x10] sm:$0xff]
    %v498 = vld [vmem:[%s3 + $0x18] sm:$0xff]
    %v499 = vld [vmem:[%s3 + $0x20] sm:$0xff]
    %v500 = vld [vmem:[%s3 + $0x28] sm:$0xff]
    %v501 = vld [vmem:[%s3 + $0x30] sm:$0xff]
    %v502 = vld [vmem:[%s3 + $0x38] sm:$0xff]
    %v503 = vld [vmem:[%s3 + $0x40] sm:$0xff]
    %v504 = vld [vmem:[%s3 + $0x48] sm:$0xff]
    %v505 = vld [vmem:[%s3 + $0x50] sm:$0xff]
    %v506 = vld [vmem:[%s3 + $0x58] sm:$0xff]
    %v507 = vld [vmem:[%s3 + $0x60] sm:$0xff]
    %v508 = vld [vmem:[%s3 + $0x68] sm:$0xff]
    %v509 = vld [vmem:[%s3 + $0x70] sm:$0xff]
    %v510 = vld [vmem:[%s3 + $0x78] sm:$0xff]
    %512 = vset.pattern.permute.xlu0 0
    %513 = vperm.xlu0 %512, %v495
    %v514 = vpop.permute.xlu0 %513
    %517 = vset.pattern.permute.xlu0 0
    %518 = vperm.xlu0 %517, %v496
    %v519 = vpop.permute.xlu0 %518
    %522 = vset.pattern.permute.xlu0 0
    %523 = vperm.xlu0 %522, %v497
    %v524 = vpop.permute.xlu0 %523
    %527 = vset.pattern.permute.xlu0 0
    %528 = vperm.xlu0 %527, %v498
    %v529 = vpop.permute.xlu0 %528
    %532 = vset.pattern.permute.xlu0 0
    %533 = vperm.xlu0 %532, %v499
    %v534 = vpop.permute.xlu0 %533
    %537 = vset.pattern.permute.xlu0 0
    %538 = vperm.xlu0 %537, %v500
    %v539 = vpop.permute.xlu0 %538
    %542 = vset.pattern.permute.xlu0 0
    %543 = vperm.xlu0 %542, %v501
    %v544 = vpop.permute.xlu0 %543
    %547 = vset.pattern.permute.xlu0 0
    %548 = vperm.xlu0 %547, %v502
    %v549 = vpop.permute.xlu0 %548
    %552 = vset.pattern.permute.xlu0 0
    %553 = vperm.xlu0 %552, %v503
    %v554 = vpop.permute.xlu0 %553
    %557 = vset.pattern.permute.xlu0 0
    %558 = vperm.xlu0 %557, %v504
    %v559 = vpop.permute.xlu0 %558
    %562 = vset.pattern.permute.xlu0 0
    %563 = vperm.xlu0 %562, %v505
    %v564 = vpop.permute.xlu0 %563
    %567 = vset.pattern.permute.xlu0 0
    %568 = vperm.xlu0 %567, %v506
    %v569 = vpop.permute.xlu0 %568
    %572 = vset.pattern.permute.xlu0 0
    %573 = vperm.xlu0 %572, %v507
    %v574 = vpop.permute.xlu0 %573
    %577 = vset.pattern.permute.xlu0 0
    %578 = vperm.xlu0 %577, %v508
    %v579 = vpop.permute.xlu0 %578
    %582 = vset.pattern.permute.xlu0 0
    %583 = vperm.xlu0 %582, %v509
    %v584 = vpop.permute.xlu0 %583
    %587 = vset.pattern.permute.xlu0 0
    %588 = vperm.xlu0 %587, %v510
    %v589 = vpop.permute.xlu0 %588
    %v591 = vadd.f32 %v479, %v514
    %v592 = vadd.f32 %v480, %v519
    %v593 = vadd.f32 %v481, %v524
    %v594 = vadd.f32 %v482, %v529
    %v595 = vadd.f32 %v483, %v534
    %v596 = vadd.f32 %v484, %v539
    %v597 = vadd.f32 %v485, %v544
    %v598 = vadd.f32 %v486, %v549
    %v599 = vadd.f32 %v487, %v554
    %v600 = vadd.f32 %v488, %v559
    %v601 = vadd.f32 %v489, %v564
    %v602 = vadd.f32 %v490, %v569
    %v603 = vadd.f32 %v491, %v574
    %v604 = vadd.f32 %v492, %v579
    %v605 = vadd.f32 %v493, %v584
    %v606 = vadd.f32 %v494, %v589
    %v607 = vmax.f32 %v591, 0.0
    %v608 = vmax.f32 %v592, 0.0
    %v609 = vmax.f32 %v593, 0.0
    %v610 = vmax.f32 %v594, 0.0
    %v611 = vmax.f32 %v595, 0.0
    %v612 = vmax.f32 %v596, 0.0
    %v613 = vmax.f32 %v597, 0.0
    %v614 = vmax.f32 %v598, 0.0
    %v615 = vmax.f32 %v599, 0.0
    %v616 = vmax.f32 %v600, 0.0
    %v617 = vmax.f32 %v601, 0.0
    %v618 = vmax.f32 %v602, 0.0
    %v619 = vmax.f32 %v603, 0.0
    %v620 = vmax.f32 %v604, 0.0
    %v621 = vmax.f32 %v605, 0.0
    %v622 = vmax.f32 %v606, 0.0
    %v623 = vld [vmem:[%s1] sm:$0x1]
    %v625 = vperm.slane %v623, 0
    %v627 = vmul.f32 %v607, %v625
    %v628 = vmul.f32 %v608, %v625
    %v629 = vmul.f32 %v609, %v625
    %v630 = vmul.f32 %v610, %v625
    %v631 = vmul.f32 %v611, %v625
    %v632 = vmul.f32 %v612, %v625
    %v633 = vmul.f32 %v613, %v625
    %v634 = vmul.f32 %v614, %v625
    %v635 = vmul.f32 %v615, %v625
    %v636 = vmul.f32 %v616, %v625
    %v637 = vmul.f32 %v617, %v625
    %v638 = vmul.f32 %v618, %v625
    %v639 = vmul.f32 %v619, %v625
    %v640 = vmul.f32 %v620, %v625
    %v641 = vmul.f32 %v621, %v625
    %v642 = vmul.f32 %v622, %v625
    %v643 = vpack.c.bf16 %v627, %v627
    %v644 = vpack.c.bf16 %v628, %v628
    %v645 = vpack.c.bf16 %v629, %v629
    %v646 = vpack.c.bf16 %v630, %v630
    %v647 = vpack.c.bf16 %v631, %v631
    %v648 = vpack.c.bf16 %v632, %v632
    %v649 = vpack.c.bf16 %v633, %v633
    %v650 = vpack.c.bf16 %v634, %v634
    %v651 = vpack.c.bf16 %v635, %v635
    %v652 = vpack.c.bf16 %v636, %v636
    %v653 = vpack.c.bf16 %v637, %v637
    %v654 = vpack.c.bf16 %v638, %v638
    %v655 = vpack.c.bf16 %v639, %v639
    %v656 = vpack.c.bf16 %v640, %v640
    %v657 = vpack.c.bf16 %v641, %v641
    %v658 = vpack.c.bf16 %v642, %v642
    %vm659 = vcmask 3072
    %660 = vst.msk [vmem:[#allocation2] sm:$0xf] %vm659, 0
    %661 = vst.msk [vmem:[#allocation2 + $0x4] sm:$0xf] %vm659, 0
    %662 = vst.msk [vmem:[#allocation2 + $0x8] sm:$0xf] %vm659, 0
    %663 = vst.msk [vmem:[#allocation2 + $0xc] sm:$0xf] %vm659, 0
    %664 = vst.msk [vmem:[#allocation2 + $0x10] sm:$0xf] %vm659, 0
    %665 = vst.msk [vmem:[#allocation2 + $0x14] sm:$0xf] %vm659, 0
    %666 = vst.msk [vmem:[#allocation2 + $0x18] sm:$0xf] %vm659, 0
    %667 = vst.msk [vmem:[#allocation2 + $0x1c] sm:$0xf] %vm659, 0
    %668 = vst.msk [vmem:[#allocation2 + $0x20] sm:$0xf] %vm659, 0
    %669 = vst.msk [vmem:[#allocation2 + $0x24] sm:$0xf] %vm659, 0
    %670 = vst.msk [vmem:[#allocation2 + $0x28] sm:$0xf] %vm659, 0
    %671 = vst.msk [vmem:[#allocation2 + $0x2c] sm:$0xf] %vm659, 0
    %672 = vst.msk [vmem:[#allocation2 + $0x30] sm:$0xf] %vm659, 0
    %673 = vst.msk [vmem:[#allocation2 + $0x34] sm:$0xf] %vm659, 0
    %674 = vst.msk [vmem:[#allocation2 + $0x38] sm:$0xf] %vm659, 0
    %675 = vst.msk [vmem:[#allocation2 + $0x3c] sm:$0xf] %vm659, 0
    %vm676 = vcmask 306472
    %677 = vst.msk [vmem:[#allocation2] sm:$0xf] %vm676, 0
    %678 = vst.msk [vmem:[#allocation2 + $0x4] sm:$0xf] %vm676, 0
    %679 = vst.msk [vmem:[#allocation2 + $0x8] sm:$0xf] %vm676, 0
    %680 = vst.msk [vmem:[#allocation2 + $0xc] sm:$0xf] %vm676, 0
    %681 = vst.msk [vmem:[#allocation2 + $0x10] sm:$0xf] %vm676, 0
    %682 = vst.msk [vmem:[#allocation2 + $0x14] sm:$0xf] %vm676, 0
    %683 = vst.msk [vmem:[#allocation2 + $0x18] sm:$0xf] %vm676, 0
    %684 = vst.msk [vmem:[#allocation2 + $0x1c] sm:$0xf] %vm676, 0
    %685 = vst.msk [vmem:[#allocation2 + $0x20] sm:$0xf] %vm676, 0
    %686 = vst.msk [vmem:[#allocation2 + $0x24] sm:$0xf] %vm676, 0
    %687 = vst.msk [vmem:[#allocation2 + $0x28] sm:$0xf] %vm676, 0
    %688 = vst.msk [vmem:[#allocation2 + $0x2c] sm:$0xf] %vm676, 0
    %689 = vst.msk [vmem:[#allocation2 + $0x30] sm:$0xf] %vm676, 0
    %690 = vst.msk [vmem:[#allocation2 + $0x34] sm:$0xf] %vm676, 0
    %691 = vst.msk [vmem:[#allocation2 + $0x38] sm:$0xf] %vm676, 0
    %692 = vst.msk [vmem:[#allocation2 + $0x3c] sm:$0xf] %vm676, 0
    %709 = vrot.lane.b32.xlu0 %v643, 1
    %v710 = vpop.permute.xlu0 %709
    %711 = vrot.lane.b32.xlu0 %v644, 1
    %v712 = vpop.permute.xlu0 %711
    %713 = vrot.lane.b32.xlu0 %v645, 1
    %v714 = vpop.permute.xlu0 %713
    %715 = vrot.lane.b32.xlu0 %v646, 1
    %v716 = vpop.permute.xlu0 %715
    %717 = vrot.lane.b32.xlu0 %v647, 1
    %v718 = vpop.permute.xlu0 %717
    %719 = vrot.lane.b32.xlu0 %v648, 1
    %v720 = vpop.permute.xlu0 %719
    %721 = vrot.lane.b32.xlu0 %v649, 1
    %v722 = vpop.permute.xlu0 %721
    %723 = vrot.lane.b32.xlu0 %v650, 1
    %v724 = vpop.permute.xlu0 %723
    %725 = vrot.lane.b32.xlu0 %v651, 1
    %v726 = vpop.permute.xlu0 %725
    %727 = vrot.lane.b32.xlu0 %v652, 1
    %v728 = vpop.permute.xlu0 %727
    %729 = vrot.lane.b32.xlu0 %v653, 1
    %v730 = vpop.permute.xlu0 %729
    %731 = vrot.lane.b32.xlu0 %v654, 1
    %v732 = vpop.permute.xlu0 %731
    %733 = vrot.lane.b32.xlu0 %v655, 1
    %v734 = vpop.permute.xlu0 %733
    %735 = vrot.lane.b32.xlu0 %v656, 1
    %v736 = vpop.permute.xlu0 %735
    %737 = vrot.lane.b32.xlu0 %v657, 1
    %v738 = vpop.permute.xlu0 %737
    %739 = vrot.lane.b32.xlu0 %v658, 1
    %v740 = vpop.permute.xlu0 %739
    %vm757 = vcmask 297992
    %758 = vst.msk [vmem:[#allocation2] sm:$0xf] %vm757, %v710
    %759 = vst.msk [vmem:[#allocation2 + $0x4] sm:$0xf] %vm757, %v712
    %760 = vst.msk [vmem:[#allocation2 + $0x8] sm:$0xf] %vm757, %v714
    %761 = vst.msk [vmem:[#allocation2 + $0xc] sm:$0xf] %vm757, %v716
    %762 = vst.msk [vmem:[#allocation2 + $0x10] sm:$0xf] %vm757, %v718
    %763 = vst.msk [vmem:[#allocation2 + $0x14] sm:$0xf] %vm757, %v720
    %764 = vst.msk [vmem:[#allocation2 + $0x18] sm:$0xf] %vm757, %v722
    %765 = vst.msk [vmem:[#allocation2 + $0x1c] sm:$0xf] %vm757, %v724
    %766 = vst.msk [vmem:[#allocation2 + $0x20] sm:$0xf] %vm757, %v726
    %767 = vst.msk [vmem:[#allocation2 + $0x24] sm:$0xf] %vm757, %v728
    %768 = vst.msk [vmem:[#allocation2 + $0x28] sm:$0xf] %vm757, %v730
    %769 = vst.msk [vmem:[#allocation2 + $0x2c] sm:$0xf] %vm757, %v732
    %770 = vst.msk [vmem:[#allocation2 + $0x30] sm:$0xf] %vm757, %v734
    %771 = vst.msk [vmem:[#allocation2 + $0x34] sm:$0xf] %vm757, %v736
    %772 = vst.msk [vmem:[#allocation2 + $0x38] sm:$0xf] %vm757, %v738
    %773 = vst.msk [vmem:[#allocation2 + $0x3c] sm:$0xf] %vm757, %v740
    %s774 = scalar_lea.vmem %s4, 64
    %v775 = vld [vmem:[%s774] sm:$0xf]
    %v776 = vld [vmem:[%s774 + $0x4] sm:$0xf]
    %v777 = vld [vmem:[%s774 + $0x8] sm:$0xf]
    %v778 = vld [vmem:[%s774 + $0xc] sm:$0xf]
    %v779 = vld [vmem:[%s774 + $0x10] sm:$0xf]
    %v780 = vld [vmem:[%s774 + $0x14] sm:$0xf]
    %v781 = vld [vmem:[%s774 + $0x18] sm:$0xf]
    %v782 = vld [vmem:[%s774 + $0x1c] sm:$0xf]
    %v783 = vld [vmem:[%s774 + $0x20] sm:$0xf]
    %v784 = vld [vmem:[%s774 + $0x24] sm:$0xf]
    %v785 = vld [vmem:[%s774 + $0x28] sm:$0xf]
    %v786 = vld [vmem:[%s774 + $0x2c] sm:$0xf]
    %v787 = vld [vmem:[%s774 + $0x30] sm:$0xf]
    %v788 = vld [vmem:[%s774 + $0x34] sm:$0xf]
    %v789 = vld [vmem:[%s774 + $0x38] sm:$0xf]
    %v790 = vld [vmem:[%s774 + $0x3c] sm:$0xf]
    %v791 = vld [vmem:[%s4] sm:$0xf]
    %v792 = vld [vmem:[%s4 + $0x4] sm:$0xf]
    %v793 = vld [vmem:[%s4 + $0x8] sm:$0xf]
    %v794 = vld [vmem:[%s4 + $0xc] sm:$0xf]
    %v795 = vld [vmem:[%s4 + $0x10] sm:$0xf]
    %v796 = vld [vmem:[%s4 + $0x14] sm:$0xf]
    %v797 = vld [vmem:[%s4 + $0x18] sm:$0xf]
    %v798 = vld [vmem:[%s4 + $0x1c] sm:$0xf]
    %v799 = vld [vmem:[%s4 + $0x20] sm:$0xf]
    %v800 = vld [vmem:[%s4 + $0x24] sm:$0xf]
    %v801 = vld [vmem:[%s4 + $0x28] sm:$0xf]
    %v802 = vld [vmem:[%s4 + $0x2c] sm:$0xf]
    %v803 = vld [vmem:[%s4 + $0x30] sm:$0xf]
    %v804 = vld [vmem:[%s4 + $0x34] sm:$0xf]
    %v805 = vld [vmem:[%s4 + $0x38] sm:$0xf]
    %v806 = vld [vmem:[%s4 + $0x3c] sm:$0xf]
    %v807 = vld [vmem:[#allocation2] sm:$0xf]
    %v808 = vld [vmem:[#allocation2 + $0x4] sm:$0xf]
    %v809 = vld [vmem:[#allocation2 + $0x8] sm:$0xf]
    %v810 = vld [vmem:[#allocation2 + $0xc] sm:$0xf]
    %v811 = vld [vmem:[#allocation2 + $0x10] sm:$0xf]
    %v812 = vld [vmem:[#allocation2 + $0x14] sm:$0xf]
    %v813 = vld [vmem:[#allocation2 + $0x18] sm:$0xf]
    %v814 = vld [vmem:[#allocation2 + $0x1c] sm:$0xf]
    %v815 = vld [vmem:[#allocation2 + $0x20] sm:$0xf]
    %v816 = vld [vmem:[#allocation2 + $0x24] sm:$0xf]
    %v817 = vld [vmem:[#allocation2 + $0x28] sm:$0xf]
    %v818 = vld [vmem:[#allocation2 + $0x2c] sm:$0xf]
    %v819 = vld [vmem:[#allocation2 + $0x30] sm:$0xf]
    %v820 = vld [vmem:[#allocation2 + $0x34] sm:$0xf]
    %v821 = vld [vmem:[#allocation2 + $0x38] sm:$0xf]
    %v822 = vld [vmem:[#allocation2 + $0x3c] sm:$0xf]
    %v839 = vunpack.c.l.b16 %v791
    %v840 = vunpack.c.l.b16 %v792
    %v841 = vunpack.c.l.b16 %v793
    %v842 = vunpack.c.l.b16 %v794
    %v843 = vunpack.c.l.b16 %v795
    %v844 = vunpack.c.l.b16 %v796
    %v845 = vunpack.c.l.b16 %v797
    %v846 = vunpack.c.l.b16 %v798
    %v847 = vunpack.c.l.b16 %v799
    %v848 = vunpack.c.l.b16 %v800
    %v849 = vunpack.c.l.b16 %v801
    %v850 = vunpack.c.l.b16 %v802
    %v851 = vunpack.c.l.b16 %v803
    %v852 = vunpack.c.l.b16 %v804
    %v853 = vunpack.c.l.b16 %v805
    %v854 = vunpack.c.l.b16 %v806
    %v855 = vpack.c.b16 %v840, %v839
    %v856 = vpack.c.b16 %v842, %v841
    %v857 = vpack.c.b16 %v844, %v843
    %v858 = vpack.c.b16 %v846, %v845
    %v859 = vpack.c.b16 %v848, %v847
    %v860 = vpack.c.b16 %v850, %v849
    %v861 = vpack.c.b16 %v852, %v851
    %v862 = vpack.c.b16 %v854, %v853
    %v887 = vunpack.c.l.b16 %v807
    %v888 = vunpack.c.l.b16 %v808
    %v889 = vunpack.c.l.b16 %v809
    %v890 = vunpack.c.l.b16 %v810
    %v891 = vunpack.c.l.b16 %v811
    %v892 = vunpack.c.l.b16 %v812
    %v893 = vunpack.c.l.b16 %v813
    %v894 = vunpack.c.l.b16 %v814
    %v895 = vunpack.c.l.b16 %v815
    %v896 = vunpack.c.l.b16 %v816
    %v897 = vunpack.c.l.b16 %v817
    %v898 = vunpack.c.l.b16 %v818
    %v899 = vunpack.c.l.b16 %v819
    %v900 = vunpack.c.l.b16 %v820
    %v901 = vunpack.c.l.b16 %v821
    %v902 = vunpack.c.l.b16 %v822
    %v903 = vpack.c.b16 %v888, %v887
    %v904 = vpack.c.b16 %v890, %v889
    %v905 = vpack.c.b16 %v892, %v891
    %v906 = vpack.c.b16 %v894, %v893
    %v907 = vpack.c.b16 %v896, %v895
    %v908 = vpack.c.b16 %v898, %v897
    %v909 = vpack.c.b16 %v900, %v899
    %v910 = vpack.c.b16 %v902, %v901
    %919 = vmatpush.bf16.msra.mxu0 %v910
    %920 = vmatpush.bf16.msra.mxu0 %v909
    %921 = vmatpush.bf16.msra.mxu0 %v908
    %922 = vmatpush.bf16.msra.mxu0 %v907
    %923 = vmatpush.bf16.msra.mxu0 %v906
    %924 = vmatpush.bf16.msra.mxu0 %v905
    %925 = vmatpush.bf16.msra.mxu0 %v904
    %926 = vmatpush.bf16.msra.mxu0 %v903
    %927 = vmatmul.bf16.gmra.mxu0 %v855
    %v928 = vpop.f32.mrf.mxu0
    %v929 = vadd.f32 0.0, %v928
    %v930 = vpop.f32.mrf.mxu0
    %v931 = vadd.f32 0.0, %v930
    %932 = vmatmul.bf16.gmra.mxu0 %v856
    %v933 = vpop.f32.mrf.mxu0
    %v934 = vadd.f32 0.0, %v933
    %v935 = vpop.f32.mrf.mxu0
    %v936 = vadd.f32 0.0, %v935
    %937 = vmatmul.bf16.gmra.mxu0 %v857
    %v938 = vpop.f32.mrf.mxu0
    %v939 = vadd.f32 0.0, %v938
    %v940 = vpop.f32.mrf.mxu0
    %v941 = vadd.f32 0.0, %v940
    %942 = vmatmul.bf16.gmra.mxu0 %v858
    %v943 = vpop.f32.mrf.mxu0
    %v944 = vadd.f32 0.0, %v943
    %v945 = vpop.f32.mrf.mxu0
    %v946 = vadd.f32 0.0, %v945
    %947 = vmatmul.bf16.gmra.mxu0 %v859
    %v948 = vpop.f32.mrf.mxu0
    %v949 = vadd.f32 0.0, %v948
    %v950 = vpop.f32.mrf.mxu0
    %v951 = vadd.f32 0.0, %v950
    %952 = vmatmul.bf16.gmra.mxu0 %v860
    %v953 = vpop.f32.mrf.mxu0
    %v954 = vadd.f32 0.0, %v953
    %v955 = vpop.f32.mrf.mxu0
    %v956 = vadd.f32 0.0, %v955
    %957 = vmatmul.bf16.gmra.mxu0 %v861
    %v958 = vpop.f32.mrf.mxu0
    %v959 = vadd.f32 0.0, %v958
    %v960 = vpop.f32.mrf.mxu0
    %v961 = vadd.f32 0.0, %v960
    %962 = vmatmul.bf16.gmra.mxu0 %v862
    %v963 = vpop.f32.mrf.mxu0
    %v964 = vadd.f32 0.0, %v963
    %v965 = vpop.f32.mrf.mxu0
    %v966 = vadd.f32 0.0, %v965
    %967 = vdwg.mxu0
    %v984 = vunpack.c.l.b16 %v775
    %v985 = vunpack.c.l.b16 %v776
    %v986 = vunpack.c.l.b16 %v777
    %v987 = vunpack.c.l.b16 %v778
    %v988 = vunpack.c.l.b16 %v779
    %v989 = vunpack.c.l.b16 %v780
    %v990 = vunpack.c.l.b16 %v781
    %v991 = vunpack.c.l.b16 %v782
    %v992 = vunpack.c.l.b16 %v783
    %v993 = vunpack.c.l.b16 %v784
    %v994 = vunpack.c.l.b16 %v785
    %v995 = vunpack.c.l.b16 %v786
    %v996 = vunpack.c.l.b16 %v787
    %v997 = vunpack.c.l.b16 %v788
    %v998 = vunpack.c.l.b16 %v789
    %v999 = vunpack.c.l.b16 %v790
    %v1000 = vpack.c.b16 %v985, %v984
    %v1001 = vpack.c.b16 %v987, %v986
    %v1002 = vpack.c.b16 %v989, %v988
    %v1003 = vpack.c.b16 %v991, %v990
    %v1004 = vpack.c.b16 %v993, %v992
    %v1005 = vpack.c.b16 %v995, %v994
    %v1006 = vpack.c.b16 %v997, %v996
    %v1007 = vpack.c.b16 %v999, %v998
    %v1016 = vunpack.c.l.b16 %v643
    %v1017 = vunpack.c.l.b16 %v644
    %v1018 = vunpack.c.l.b16 %v645
    %v1019 = vunpack.c.l.b16 %v646
    %v1020 = vunpack.c.l.b16 %v647
    %v1021 = vunpack.c.l.b16 %v648
    %v1022 = vunpack.c.l.b16 %v649
    %v1023 = vunpack.c.l.b16 %v650
    %v1024 = vunpack.c.l.b16 %v651
    %v1025 = vunpack.c.l.b16 %v652
    %v1026 = vunpack.c.l.b16 %v653
    %v1027 = vunpack.c.l.b16 %v654
    %v1028 = vunpack.c.l.b16 %v655
    %v1029 = vunpack.c.l.b16 %v656
    %v1030 = vunpack.c.l.b16 %v657
    %v1031 = vunpack.c.l.b16 %v658
    %v1032 = vpack.c.b16 %v1017, %v1016
    %v1033 = vpack.c.b16 %v1019, %v1018
    %v1034 = vpack.c.b16 %v1021, %v1020
    %v1035 = vpack.c.b16 %v1023, %v1022
    %v1036 = vpack.c.b16 %v1025, %v1024
    %v1037 = vpack.c.b16 %v1027, %v1026
    %v1038 = vpack.c.b16 %v1029, %v1028
    %v1039 = vpack.c.b16 %v1031, %v1030
    %1048 = vmatpush.bf16.msra.mxu0 %v1039
    %1049 = vmatpush.bf16.msra.mxu0 %v1038
    %1050 = vmatpush.bf16.msra.mxu0 %v1037
    %1051 = vmatpush.bf16.msra.mxu0 %v1036
    %1052 = vmatpush.bf16.msra.mxu0 %v1035
    %1053 = vmatpush.bf16.msra.mxu0 %v1034
    %1054 = vmatpush.bf16.msra.mxu0 %v1033
    %1055 = vmatpush.bf16.msra.mxu0 %v1032
    %1056 = vmatmul.bf16.gmra.mxu0 %v1000
    %v1057 = vpop.f32.mrf.mxu0
    %v1058 = vadd.f32 %v929, %v1057
    %v1059 = vpop.f32.mrf.mxu0
    %v1060 = vadd.f32 %v931, %v1059
    %1061 = vmatmul.bf16.gmra.mxu0 %v1001
    %v1062 = vpop.f32.mrf.mxu0
    %v1063 = vadd.f32 %v934, %v1062
    %v1064 = vpop.f32.mrf.mxu0
    %v1065 = vadd.f32 %v936, %v1064
    %1066 = vmatmul.bf16.gmra.mxu0 %v1002
    %v1067 = vpop.f32.mrf.mxu0
    %v1068 = vadd.f32 %v939, %v1067
    %v1069 = vpop.f32.mrf.mxu0
    %v1070 = vadd.f32 %v941, %v1069
    %1071 = vmatmul.bf16.gmra.mxu0 %v1003
    %v1072 = vpop.f32.mrf.mxu0
    %v1073 = vadd.f32 %v944, %v1072
    %v1074 = vpop.f32.mrf.mxu0
    %v1075 = vadd.f32 %v946, %v1074
    %1076 = vmatmul.bf16.gmra.mxu0 %v1004
    %v1077 = vpop.f32.mrf.mxu0
    %v1078 = vadd.f32 %v949, %v1077
    %v1079 = vpop.f32.mrf.mxu0
    %v1080 = vadd.f32 %v951, %v1079
    %1081 = vmatmul.bf16.gmra.mxu0 %v1005
    %v1082 = vpop.f32.mrf.mxu0
    %v1083 = vadd.f32 %v954, %v1082
    %v1084 = vpop.f32.mrf.mxu0
    %v1085 = vadd.f32 %v956, %v1084
    %1086 = vmatmul.bf16.gmra.mxu0 %v1006
    %v1087 = vpop.f32.mrf.mxu0
    %v1088 = vadd.f32 %v959, %v1087
    %v1089 = vpop.f32.mrf.mxu0
    %v1090 = vadd.f32 %v961, %v1089
    %1091 = vmatmul.bf16.gmra.mxu0 %v1007
    %v1092 = vpop.f32.mrf.mxu0
    %v1093 = vadd.f32 %v964, %v1092
    %v1094 = vpop.f32.mrf.mxu0
    %v1095 = vadd.f32 %v966, %v1094
    %1096 = vdwg.mxu0
    %s1097 = scalar_lea.vmem %s4, 128
    %v1098 = vld [vmem:[%s1097] sm:$0xf]
    %v1099 = vld [vmem:[%s1097 + $0x4] sm:$0xf]
    %v1100 = vld [vmem:[%s1097 + $0x8] sm:$0xf]
    %v1101 = vld [vmem:[%s1097 + $0xc] sm:$0xf]
    %v1102 = vld [vmem:[%s1097 + $0x10] sm:$0xf]
    %v1103 = vld [vmem:[%s1097 + $0x14] sm:$0xf]
    %v1104 = vld [vmem:[%s1097 + $0x18] sm:$0xf]
    %v1105 = vld [vmem:[%s1097 + $0x1c] sm:$0xf]
    %v1106 = vld [vmem:[%s1097 + $0x20] sm:$0xf]
    %v1107 = vld [vmem:[%s1097 + $0x24] sm:$0xf]
    %v1108 = vld [vmem:[%s1097 + $0x28] sm:$0xf]
    %v1109 = vld [vmem:[%s1097 + $0x2c] sm:$0xf]
    %v1110 = vld [vmem:[%s1097 + $0x30] sm:$0xf]
    %v1111 = vld [vmem:[%s1097 + $0x34] sm:$0xf]
    %v1112 = vld [vmem:[%s1097 + $0x38] sm:$0xf]
    %v1113 = vld [vmem:[%s1097 + $0x3c] sm:$0xf]
    %v1130 = vunpack.c.l.b16 %v1098
    %v1131 = vunpack.c.l.b16 %v1099
    %v1132 = vunpack.c.l.b16 %v1100
    %v1133 = vunpack.c.l.b16 %v1101
    %v1134 = vunpack.c.l.b16 %v1102
    %v1135 = vunpack.c.l.b16 %v1103
    %v1136 = vunpack.c.l.b16 %v1104
    %v1137 = vunpack.c.l.b16 %v1105
    %v1138 = vunpack.c.l.b16 %v1106
    %v1139 = vunpack.c.l.b16 %v1107
    %v1140 = vunpack.c.l.b16 %v1108
    %v1141 = vunpack.c.l.b16 %v1109
    %v1142 = vunpack.c.l.b16 %v1110
    %v1143 = vunpack.c.l.b16 %v1111
    %v1144 = vunpack.c.l.b16 %v1112
    %v1145 = vunpack.c.l.b16 %v1113
    %v1146 = vpack.c.b16 %v1131, %v1130
    %v1147 = vpack.c.b16 %v1133, %v1132
    %v1148 = vpack.c.b16 %v1135, %v1134
    %v1149 = vpack.c.b16 %v1137, %v1136
    %v1150 = vpack.c.b16 %v1139, %v1138
    %v1151 = vpack.c.b16 %v1141, %v1140
    %v1152 = vpack.c.b16 %v1143, %v1142
    %v1153 = vpack.c.b16 %v1145, %v1144
    %1162 = vrot.lane.b32.xlu0 %v903, 126
    %v1163 = vpop.permute.xlu0 %1162
    %1164 = vrot.lane.b32.xlu0 %v904, 126
    %v1165 = vpop.permute.xlu0 %1164
    %1166 = vrot.lane.b32.xlu0 %v905, 126
    %v1167 = vpop.permute.xlu0 %1166
    %1168 = vrot.lane.b32.xlu0 %v906, 126
    %v1169 = vpop.permute.xlu0 %1168
    %1170 = vrot.lane.b32.xlu0 %v907, 126
    %v1171 = vpop.permute.xlu0 %1170
    %1172 = vrot.lane.b32.xlu0 %v908, 126
    %v1173 = vpop.permute.xlu0 %1172
    %1174 = vrot.lane.b32.xlu0 %v909, 126
    %v1175 = vpop.permute.xlu0 %1174
    %1176 = vrot.lane.b32.xlu0 %v910, 126
    %v1177 = vpop.permute.xlu0 %1176
    %1186 = vmatpush.bf16.msra.mxu0 %v1177
    %1187 = vmatpush.bf16.msra.mxu0 %v1175
    %1188 = vmatpush.bf16.msra.mxu0 %v1173
    %1189 = vmatpush.bf16.msra.mxu0 %v1171
    %1190 = vmatpush.bf16.msra.mxu0 %v1169
    %1191 = vmatpush.bf16.msra.mxu0 %v1167
    %1192 = vmatpush.bf16.msra.mxu0 %v1165
    %1193 = vmatpush.bf16.msra.mxu0 %v1163
    %1194 = vmatmul.bf16.gmra.mxu0 %v1146
    %v1195 = vpop.f32.mrf.mxu0
    %v1196 = vadd.f32 0.0, %v1195
    %v1197 = vpop.f32.mrf.mxu0
    %v1198 = vadd.f32 0.0, %v1197
    %1199 = vmatmul.bf16.gmra.mxu0 %v1147
    %v1200 = vpop.f32.mrf.mxu0
    %v1201 = vadd.f32 0.0, %v1200
    %v1202 = vpop.f32.mrf.mxu0
    %v1203 = vadd.f32 0.0, %v1202
    %1204 = vmatmul.bf16.gmra.mxu0 %v1148
    %v1205 = vpop.f32.mrf.mxu0
    %v1206 = vadd.f32 0.0, %v1205
    %v1207 = vpop.f32.mrf.mxu0
    %v1208 = vadd.f32 0.0, %v1207
    %1209 = vmatmul.bf16.gmra.mxu0 %v1149
    %v1210 = vpop.f32.mrf.mxu0
    %v1211 = vadd.f32 0.0, %v1210
    %v1212 = vpop.f32.mrf.mxu0
    %v1213 = vadd.f32 0.0, %v1212
    %1214 = vmatmul.bf16.gmra.mxu0 %v1150
    %v1215 = vpop.f32.mrf.mxu0
    %v1216 = vadd.f32 0.0, %v1215
    %v1217 = vpop.f32.mrf.mxu0
    %v1218 = vadd.f32 0.0, %v1217
    %1219 = vmatmul.bf16.gmra.mxu0 %v1151
    %v1220 = vpop.f32.mrf.mxu0
    %v1221 = vadd.f32 0.0, %v1220
    %v1222 = vpop.f32.mrf.mxu0
    %v1223 = vadd.f32 0.0, %v1222
    %1224 = vmatmul.bf16.gmra.mxu0 %v1152
    %v1225 = vpop.f32.mrf.mxu0
    %v1226 = vadd.f32 0.0, %v1225
    %v1227 = vpop.f32.mrf.mxu0
    %v1228 = vadd.f32 0.0, %v1227
    %1229 = vmatmul.bf16.gmra.mxu0 %v1153
    %v1230 = vpop.f32.mrf.mxu0
    %v1231 = vadd.f32 0.0, %v1230
    %v1232 = vpop.f32.mrf.mxu0
    %v1233 = vadd.f32 0.0, %v1232
    %1234 = vdwg.mxu0
    %v1235 = vadd.f32 %v1058, %v1196
    %v1236 = vadd.f32 %v1060, %v1198
    %v1237 = vadd.f32 %v1063, %v1201
    %v1238 = vadd.f32 %v1065, %v1203
    %v1239 = vadd.f32 %v1068, %v1206
    %v1240 = vadd.f32 %v1070, %v1208
    %v1241 = vadd.f32 %v1073, %v1211
    %v1242 = vadd.f32 %v1075, %v1213
    %v1243 = vadd.f32 %v1078, %v1216
    %v1244 = vadd.f32 %v1080, %v1218
    %v1245 = vadd.f32 %v1083, %v1221
    %v1246 = vadd.f32 %v1085, %v1223
    %v1247 = vadd.f32 %v1088, %v1226
    %v1248 = vadd.f32 %v1090, %v1228
    %v1249 = vadd.f32 %v1093, %v1231
    %v1250 = vadd.f32 %v1095, %v1233
    %v1251 = vld [vmem:[%s5] sm:$0xff]
    %v1252 = vld [vmem:[%s5 + $0x8] sm:$0xff]
    %v1253 = vld [vmem:[%s5 + $0x10] sm:$0xff]
    %v1254 = vld [vmem:[%s5 + $0x18] sm:$0xff]
    %v1255 = vld [vmem:[%s5 + $0x20] sm:$0xff]
    %v1256 = vld [vmem:[%s5 + $0x28] sm:$0xff]
    %v1257 = vld [vmem:[%s5 + $0x30] sm:$0xff]
    %v1258 = vld [vmem:[%s5 + $0x38] sm:$0xff]
    %v1259 = vld [vmem:[%s5 + $0x40] sm:$0xff]
    %v1260 = vld [vmem:[%s5 + $0x48] sm:$0xff]
    %v1261 = vld [vmem:[%s5 + $0x50] sm:$0xff]
    %v1262 = vld [vmem:[%s5 + $0x58] sm:$0xff]
    %v1263 = vld [vmem:[%s5 + $0x60] sm:$0xff]
    %v1264 = vld [vmem:[%s5 + $0x68] sm:$0xff]
    %v1265 = vld [vmem:[%s5 + $0x70] sm:$0xff]
    %v1266 = vld [vmem:[%s5 + $0x78] sm:$0xff]
    %1268 = vset.pattern.permute.xlu0 0
    %1269 = vperm.xlu0 %1268, %v1251
    %v1270 = vpop.permute.xlu0 %1269
    %1273 = vset.pattern.permute.xlu0 0
    %1274 = vperm.xlu0 %1273, %v1252
    %v1275 = vpop.permute.xlu0 %1274
    %1278 = vset.pattern.permute.xlu0 0
    %1279 = vperm.xlu0 %1278, %v1253
    %v1280 = vpop.permute.xlu0 %1279
    %1283 = vset.pattern.permute.xlu0 0
    %1284 = vperm.xlu0 %1283, %v1254
    %v1285 = vpop.permute.xlu0 %1284
    %1288 = vset.pattern.permute.xlu0 0
    %1289 = vperm.xlu0 %1288, %v1255
    %v1290 = vpop.permute.xlu0 %1289
    %1293 = vset.pattern.permute.xlu0 0
    %1294 = vperm.xlu0 %1293, %v1256
    %v1295 = vpop.permute.xlu0 %1294
    %1298 = vset.pattern.permute.xlu0 0
    %1299 = vperm.xlu0 %1298, %v1257
    %v1300 = vpop.permute.xlu0 %1299
    %1303 = vset.pattern.permute.xlu0 0
    %1304 = vperm.xlu0 %1303, %v1258
    %v1305 = vpop.permute.xlu0 %1304
    %1308 = vset.pattern.permute.xlu0 0
    %1309 = vperm.xlu0 %1308, %v1259
    %v1310 = vpop.permute.xlu0 %1309
    %1313 = vset.pattern.permute.xlu0 0
    %1314 = vperm.xlu0 %1313, %v1260
    %v1315 = vpop.permute.xlu0 %1314
    %1318 = vset.pattern.permute.xlu0 0
    %1319 = vperm.xlu0 %1318, %v1261
    %v1320 = vpop.permute.xlu0 %1319
    %1323 = vset.pattern.permute.xlu0 0
    %1324 = vperm.xlu0 %1323, %v1262
    %v1325 = vpop.permute.xlu0 %1324
    %1328 = vset.pattern.permute.xlu0 0
    %1329 = vperm.xlu0 %1328, %v1263
    %v1330 = vpop.permute.xlu0 %1329
    %1333 = vset.pattern.permute.xlu0 0
    %1334 = vperm.xlu0 %1333, %v1264
    %v1335 = vpop.permute.xlu0 %1334
    %1338 = vset.pattern.permute.xlu0 0
    %1339 = vperm.xlu0 %1338, %v1265
    %v1340 = vpop.permute.xlu0 %1339
    %1343 = vset.pattern.permute.xlu0 0
    %1344 = vperm.xlu0 %1343, %v1266
    %v1345 = vpop.permute.xlu0 %1344
    %v1347 = vadd.f32 %v1235, %v1270
    %v1348 = vadd.f32 %v1236, %v1275
    %v1349 = vadd.f32 %v1237, %v1280
    %v1350 = vadd.f32 %v1238, %v1285
    %v1351 = vadd.f32 %v1239, %v1290
    %v1352 = vadd.f32 %v1240, %v1295
    %v1353 = vadd.f32 %v1241, %v1300
    %v1354 = vadd.f32 %v1242, %v1305
    %v1355 = vadd.f32 %v1243, %v1310
    %v1356 = vadd.f32 %v1244, %v1315
    %v1357 = vadd.f32 %v1245, %v1320
    %v1358 = vadd.f32 %v1246, %v1325
    %v1359 = vadd.f32 %v1247, %v1330
    %v1360 = vadd.f32 %v1248, %v1335
    %v1361 = vadd.f32 %v1249, %v1340
    %v1362 = vadd.f32 %v1250, %v1345
    %v1363 = vmax.f32 %v1347, 0.0
    %v1364 = vmax.f32 %v1348, 0.0
    %v1365 = vmax.f32 %v1349, 0.0
    %v1366 = vmax.f32 %v1350, 0.0
    %v1367 = vmax.f32 %v1351, 0.0
    %v1368 = vmax.f32 %v1352, 0.0
    %v1369 = vmax.f32 %v1353, 0.0
    %v1370 = vmax.f32 %v1354, 0.0
    %v1371 = vmax.f32 %v1355, 0.0
    %v1372 = vmax.f32 %v1356, 0.0
    %v1373 = vmax.f32 %v1357, 0.0
    %v1374 = vmax.f32 %v1358, 0.0
    %v1375 = vmax.f32 %v1359, 0.0
    %v1376 = vmax.f32 %v1360, 0.0
    %v1377 = vmax.f32 %v1361, 0.0
    %v1378 = vmax.f32 %v1362, 0.0
    %v1379 = vld [vmem:[%s6] sm:$0x1]
    %v1380 = vld [vmem:[#allocation3] sm:$0x1]
    %1382 = vset.pattern.permute.xlu0 0
    %1383 = vperm.xlu0 %1382, %v1380
    %v1384 = vpop.permute.xlu0 %1383
    %v1386 = vperm.slane %v1384, 0
    %1387 = vmatpush.msra.mxu0 %v1378
    %1388 = vmatpush.msra.mxu0 %v1377
    %1389 = vmatpush.msra.mxu0 %v1376
    %1390 = vmatpush.msra.mxu0 %v1375
    %1391 = vmatpush.msra.mxu0 %v1374
    %1392 = vmatpush.msra.mxu0 %v1373
    %1393 = vmatpush.msra.mxu0 %v1372
    %1394 = vmatpush.msra.mxu0 %v1371
    %1395 = vmatpush.msra.mxu0 %v1370
    %1396 = vmatpush.msra.mxu0 %v1369
    %1397 = vmatpush.msra.mxu0 %v1368
    %1398 = vmatpush.msra.mxu0 %v1367
    %1399 = vmatpush.msra.mxu0 %v1366
    %1400 = vmatpush.msra.mxu0 %v1365
    %1401 = vmatpush.msra.mxu0 %v1364
    %1402 = vmatpush.msra.mxu0 %v1363
    %1403 = vmatmul.f32.gmra.mxu0 %v1379
    %v1404 = vpop.f32.mrf.mxu0
    %v1405 = vadd.f32 %v1386, %v1404
    %1406 = vdwg.mxu0
    %vm1407 = vcmask 286720
    %1408 = vst.msk [vmem:[#allocation4] sm:$0x1] %vm1407, %v1405
    // Predicated region
    $region34: #{tpu_custom_call.1} parent=1 // pred_check
      _
    $region35: #{tpu_custom_call.1} parent=1 // pred_check_branch
      %1410 = sbr.rel (0) target = $region37
    $region36: #{tpu_custom_call.1} parent=1 // pred_region
      %1412 = vsyncadd [#allocation5], 0
      %s1414 = sshll.u32 [#allocation4], 4
      %s1415 = int_to_ptr.vmem [resolvable:$true] %s1414
      %s1416 = sshll.u32 %s8, 4
      %s1417 = int_to_ptr.hbm [resolvable:$true] %s1416
      %1419 = dma.vmem_to_hbm [thread:$0]  %s1415, 16, %s1417, [#allocation5]
    $region37: #{tpu_custom_call.1} parent=1 // pred_fallthru
      _
    // Predicated region
    $region38: #{tpu_custom_call.1} parent=1 // pred_check
      _
    $region39: #{tpu_custom_call.1} parent=1 // pred_check_branch
      %1421 = sbr.rel (0) target = $region41
    $region40: #{tpu_custom_call.1} parent=1 // pred_region
      %1423 = dma.done [#allocation5], 16
    $region41: #{tpu_custom_call.1} parent=1 // pred_fallthru
      _
    %1424 = vsyncpa [#allocation5], 1

</llo_original>
